<compile_context>
chip_gen: v7x
topology: tpu7x:2x2x1
jax: 0.10.0
libtpu: 0.0.40
codegen_flags: <defaults>
</compile_context>

<pallas_src>
import functools

import jax
import jax.numpy as jnp
import numpy as np
from jax.experimental import pallas as pl
from jax.experimental.pallas import tpu as pltpu


def _round_up(x, m):
    return (x + m - 1) // m * m


def _sublane_multiple(dtype):
    """Native sublane packing for a dtype (f32: 8, bf16: 16, int8/fp8: 32)."""
    return {4: 8, 2: 16, 1: 32}.get(jnp.dtype(dtype).itemsize, 8)


def _chip_config():
    """Generation-aware tuning: (per-block VMEM budget, vmem_limit_bytes, TCs/chip)."""
    kind = ""
    try:
        kind = jax.devices()[0].device_kind.lower()
    except Exception:
        pass
    n_tc = 2 if any(t in kind for t in ("v7", "v4", "v5p")) else 1
    if "v7" in kind:
        # 64 MiB physical VMEM per TC: 4 double-buffered 6 MiB blocks stay
        # under the 32 MiB default scoped limit.
        return 6 << 20, None, n_tc
    if "v6" in kind:
        # 128 MiB physical VMEM: bigger blocks amortize the ~0.35 us per-grid-
        # step overhead; raise the scoped limit so 4 x 12 MiB buffers fit.
        return 12 << 20, 64 << 20, n_tc
    # v5e (16 MiB default scoped VMEM) and unknown chips: conservative.
    return 3 << 20, None, n_tc


def _pick_hw_tile(hw, bytes_per_lane, budget, min_blocks=1):
    """Lane tile (multiple of 128, or full hw) under the VMEM budget.

    Prefers a tile that divides hw exactly (no tiny trailing block) and, when
    min_blocks > 1 and hw is large enough, caps the tile so the grid has at
    least `min_blocks` lane blocks (keeps every TensorCore busy)."""
    if hw <= 128:
        return hw
    force_split = min_blocks > 1 and hw >= min_blocks * 128
    if not force_split and hw * bytes_per_lane <= budget:
        return hw
    max_tile = max(128, (budget // bytes_per_lane) // 128 * 128)
    if force_split:
        cap = _round_up(pl.cdiv(hw, min_blocks), 128)
        if cap >= hw:  # make sure the tile actually splits hw
            cap = max(128, (hw - 1) // 128 * 128)
        max_tile = min(max_tile, cap)
    max_tile = int(max(128, min(max_tile, hw)))
    # Prefer a tile that divides hw exactly; otherwise keep the largest tile.
    if hw % max_tile != 0:
        for t in range(max_tile - 128, max(127, max_tile // 2), -128):
            if hw % t == 0:
                return t
    return max_tile


def _tsm_kernel(x_ref, o_ref, *, g0, g1, copy_identity):
    # x_ref / o_ref: (frame_depth, c_block, hw_tile) for one temporal segment.
    T, c_block, L = o_ref.shape

    if g0 > 0:
        # Group 0: forward shift (delayed one frame); frame 0 is zero-filled.
        o_ref[0:1, :g0, :] = jnp.zeros((1, g0, L), dtype=o_ref.dtype)
        if T > 1:
            o_ref[1:, :g0, :] = x_ref[: T - 1, :g0, :]

    if g1 > 0:
        # Group 1: backward shift (advanced one frame); frame T-1 zero-filled.
        o_ref[T - 1 : T, g0 : g0 + g1, :] = jnp.zeros((1, g1, L), dtype=o_ref.dtype)
        if T > 1:
            o_ref[: T - 1, g0 : g0 + g1, :] = x_ref[1:, g0 : g0 + g1, :]

    if copy_identity and g0 + g1 < c_block:
        # Identity channels carried by this block (sublane-padding channels on
        # the aliased fast path, or all remaining channels on the full path).
        o_ref[:, g0 + g1 :, :] = x_ref[:, g0 + g1 :, :]


def tsm_forward(x, frame_depth=10, fold_num=3, alias_input=True):
    """Pallas TSM forward. x: (F, C, H, W) -> (F, C, H, W).

    With alias_input=True (default) the output aliases the input and only the
    time-shifted channel block moves through HBM; donate x at the jit boundary
    (donate_argnums) so XLA does not insert a defensive copy.  Set
    alias_input=False when the input must remain live after the call.
    """
    f, c, h, w = x.shape
    assert f % frame_depth == 0, "F must be divisible by frame_depth"
    assert fold_num >= 1, "fold_num must be >= 1"
    n_fold = c // fold_num
    segment_num = f // frame_depth
    hw = h * w
    itemsize = jnp.dtype(x.dtype).itemsize

    if n_fold == 0:
        # Degenerate C < fold_num: every channel is in the identity group.
        return x

    budget, vmem_limit, n_tc = _chip_config()
    sub = _sublane_multiple(x.dtype)

    # Channel group sizes, clamped so fold_num=1 (2*n_fold > C) stays legal.
    g0 = min(n_fold, c)              # forward-shifted channels
    g1 = min(2 * n_fold, c) - g0     # backward-shifted channels
    c_shift = g0 + g1

    # Aliased fast path: cover only the shifted channels, rounded up to the
    # native sublane packing; identity channels outside the block are never
    # touched in HBM (output aliases input and keeps the input data there).
    use_alias = alias_input and c_shift < c
    c_block = min(_round_up(c_shift, sub), c) if use_alias else c
    copy_identity = c_shift < c_block

    x3 = x.reshape(f, c, hw)  # lane-dense layout: last dim is H*W

    hw_tile = _pick_hw_tile(
        hw,
        frame_depth * c_block * itemsize,
        budget,
        min_blocks=(n_tc if segment_num < n_tc else 1),
    )
    n_hw = pl.cdiv(hw, hw_tile)

    kernel = functools.partial(_tsm_kernel, g0=g0, g1=g1, copy_identity=copy_identity)

    blk = pl.BlockSpec((frame_depth, c_block, hw_tile), lambda s, j: (s, 0, j))
    bytes_moved = 2 * f * c_block * hw * itemsize  # read + write of touched channels

    out3 = pl.pallas_call(
        kernel,
        out_shape=jax.ShapeDtypeStruct((f, c, hw), x.dtype),
        grid_spec=pltpu.PrefetchScalarGridSpec(
            num_scalar_prefetch=0,
            grid=(segment_num, n_hw),
            in_specs=[blk],
            out_specs=blk,
        ),
        compiler_params=pltpu.CompilerParams(
            dimension_semantics=("parallel", "parallel"),
            vmem_limit_bytes=vmem_limit,
        ),
        cost_estimate=pl.CostEstimate(
            flops=0, transcendentals=0, bytes_accessed=bytes_moved
        ),
        input_output_aliases={0: 0} if use_alias else {},
    )(x3)

    return out3.reshape(f, c, h, w)


def tsm_reference(x, frame_depth=10, fold_num=3):
    """Pure-JAX reference mirroring the PyTorch module exactly."""
    f, c, h, w = x.shape
    n_fold = c // fold_num
    segment_num = f // frame_depth
    xv = x.reshape(segment_num, frame_depth, c, h, w)
    out = jnp.zeros_like(xv)
    out = out.at[:, 1:, :n_fold].set(xv[:, :-1, :n_fold])
    out = out.at[:, :-1, n_fold : 2 * n_fold].set(xv[:, 1:, n_fold : 2 * n_fold])
    out = out.at[:, :, 2 * n_fold :].set(xv[:, :, 2 * n_fold :])
    return out.reshape(-1, c, h, w)


if __name__ == "__main__":
    key = jax.random.PRNGKey(0)
    k1, k2, k3, k4 = jax.random.split(key, 4)
    frame_depth, fold_num = 4, 3

    # Case 1: non-sublane-aligned fold (C=32 -> n_fold=10, shifted group 20ch
    # padded to a 24-channel aliased block); jit + donation so the identity
    # channels [24, 32) are never moved through HBM.
    x1 = jax.random.normal(k1, (8, 32, 16, 16), dtype=jnp.float32)
    ref1 = np.asarray(tsm_reference(x1, frame_depth, fold_num))
    f1 = jax.jit(
        functools.partial(tsm_forward, frame_depth=frame_depth, fold_num=fold_num),
        donate_argnums=0,
    )
    out1 = jax.block_until_ready(f1(x1))
    np.testing.assert_array_equal(np.asarray(out1), ref1)

    # Case 2: sublane-aligned fold (C=24 -> n_fold=8) with H*W=144 (not a
    # multiple of 128) on the aliased fast path.
    x2 = jax.random.normal(k2, (8, 24, 12, 12), dtype=jnp.float32)
    ref2 = np.asarray(tsm_reference(x2, frame_depth, fold_num))
    f2 = jax.jit(
        functools.partial(tsm_forward, frame_depth=frame_depth, fold_num=fold_num),
        donate_argnums=0,
    )
    out2 = jax.block_until_ready(f2(x2))
    np.testing.assert_array_equal(np.asarray(out2), ref2)

    # Case 3: alias disabled (input stays live), channel-unaligned fold (C=6).
    x3 = jax.random.normal(k3, (8, 6, 16, 16), dtype=jnp.float32)
    out3 = jax.block_until_ready(
        tsm_forward(x3, frame_depth, fold_num, alias_input=False)
    )
    np.testing.assert_array_equal(
        np.asarray(out3), np.asarray(tsm_reference(x3, frame_depth, fold_num))
    )

    # Case 4: degenerate fold_num=1 (every channel forward-shifted, empty
    # backward group) — exercises the clamped group sizes.
    x4 = jax.random.normal(k4, (8, 8, 16, 16), dtype=jnp.float32)
    out4 = jax.block_until_ready(
        tsm_forward(x4, frame_depth, fold_num=1, alias_input=False)
    )
    np.testing.assert_array_equal(
        np.asarray(out4), np.asarray(tsm_reference(x4, frame_depth, 1))
    )

    print("KERNEL_OK")
</pallas_src>

<mosaic_0001>
module attributes {stable_mosaic.version = 11 : i64} {
  func.func @_tsm_kernel(%arg0: i32, %arg1: i32, %arg2: memref<4x24x256xf32, #tpu.memory_space<vmem>>, %arg3: memref<4x24x256xf32, #tpu.memory_space<vmem>>) attributes {dimension_semantics = [#tpu.dimension_semantics<parallel>, #tpu.dimension_semantics<parallel>], iteration_bounds = array<i64: 2, 1>, scalar_prefetch = 0 : i64, scratch_operands = 0 : i64, tpu.core_type = #tpu.core_type<tc>, window_params = [{transform_indices = @transform_0, window_bounds = array<i64: 4, 24, 256>}, {transform_indices = @transform_1, window_bounds = array<i64: 4, 24, 256>}]} {
    %cst = arith.constant 0.000000e+00 : f32
    %0 = vector.broadcast %cst : f32 to vector<1x10x256xf32>
    %c0 = arith.constant 0 : index
    %c0_0 = arith.constant 0 : index
    %c0_1 = arith.constant 0 : index
    %1 = vector.load %arg3[%c0, %c0_0, %c0_1] : memref<4x24x256xf32, #tpu.memory_space<vmem>>, vector<1x10x256xf32>
    tpu.vector_store %arg3[%c0, %c0_0, %c0_1], %0 {strides = array<i32>} : memref<4x24x256xf32, #tpu.memory_space<vmem>>, vector<1x10x256xf32>,
    %c0_2 = arith.constant 0 : index
    %c0_3 = arith.constant 0 : index
    %c0_4 = arith.constant 0 : index
    %2 = vector.load %arg2[%c0_2, %c0_3, %c0_4] : memref<4x24x256xf32, #tpu.memory_space<vmem>>, vector<3x10x256xf32>
    %c1 = arith.constant 1 : index
    %c0_5 = arith.constant 0 : index
    %c0_6 = arith.constant 0 : index
    %3 = vector.load %arg3[%c1, %c0_5, %c0_6] : memref<4x24x256xf32, #tpu.memory_space<vmem>>, vector<3x10x256xf32>
    tpu.vector_store %arg3[%c1, %c0_5, %c0_6], %2 {strides = array<i32>} : memref<4x24x256xf32, #tpu.memory_space<vmem>>, vector<3x10x256xf32>,
    %cst_7 = arith.constant 0.000000e+00 : f32
    %4 = vector.broadcast %cst_7 : f32 to vector<1x10x256xf32>
    %c3 = arith.constant 3 : index
    %c10 = arith.constant 10 : index
    %c0_8 = arith.constant 0 : index
    %5 = vector.load %arg3[%c3, %c10, %c0_8] : memref<4x24x256xf32, #tpu.memory_space<vmem>>, vector<1x10x256xf32>
    tpu.vector_store %arg3[%c3, %c10, %c0_8], %4 {strides = array<i32>} : memref<4x24x256xf32, #tpu.memory_space<vmem>>, vector<1x10x256xf32>,
    %c1_9 = arith.constant 1 : index
    %c10_10 = arith.constant 10 : index
    %c0_11 = arith.constant 0 : index
    %6 = vector.load %arg2[%c1_9, %c10_10, %c0_11] : memref<4x24x256xf32, #tpu.memory_space<vmem>>, vector<3x10x256xf32>
    %c0_12 = arith.constant 0 : index
    %c10_13 = arith.constant 10 : index
    %c0_14 = arith.constant 0 : index
    %7 = vector.load %arg3[%c0_12, %c10_13, %c0_14] : memref<4x24x256xf32, #tpu.memory_space<vmem>>, vector<3x10x256xf32>
    tpu.vector_store %arg3[%c0_12, %c10_13, %c0_14], %6 {strides = array<i32>} : memref<4x24x256xf32, #tpu.memory_space<vmem>>, vector<3x10x256xf32>,
    %c0_15 = arith.constant 0 : index
    %c20 = arith.constant 20 : index
    %c0_16 = arith.constant 0 : index
    %8 = vector.load %arg2[%c0_15, %c20, %c0_16] : memref<4x24x256xf32, #tpu.memory_space<vmem>>, vector<4x4x256xf32>
    %c0_17 = arith.constant 0 : index
    %c20_18 = arith.constant 20 : index
    %c0_19 = arith.constant 0 : index
    %9 = vector.load %arg3[%c0_17, %c20_18, %c0_19] : memref<4x24x256xf32, #tpu.memory_space<vmem>>, vector<4x4x256xf32>
    tpu.vector_store %arg3[%c0_17, %c20_18, %c0_19], %8 {strides = array<i32>} : memref<4x24x256xf32, #tpu.memory_space<vmem>>, vector<4x4x256xf32>,
    return
  }
  func.func @transform_0(%arg0: i32, %arg1: i32) -> (i32, i32, i32) {
    %c0_i32 = arith.constant 0 : i32
    %c0_i32_0 = arith.constant 0 : i32
    return %arg0, %c0_i32, %arg1 : i32, i32, i32
  }
  func.func @transform_1(%arg0: i32, %arg1: i32) -> (i32, i32, i32) {
    %c0_i32 = arith.constant 0 : i32
    %c0_i32_0 = arith.constant 0 : i32
    return %arg0, %c0_i32, %arg1 : i32, i32, i32
  }
}

</mosaic_0001>

<llo_original>
// kernel: tsm_forward.1
$region0: #{tsm_forward.1}
  #allocation0 [shape = 'u32[]', space=smem, size = 0x4, offset = 0x4, fixed_abs, tag = 'smem constant byte address 0x4 - core index']
  #allocation1 [shape = 'u32[144,128]{1,0:T(1,128)}', space=vmem, size = 0x12000, scoped, tag = 'internal scratch']
  %s0 = inlined_call_operand.vmem [shape: f32[8,32,256], index: 0, kind: input, shape index: {}, may-alias: {0,1}]
  %s1 = inlined_call_operand.vmem [shape: f32[8,32,256], index: 1, kind: output, shape index: {}, may-alias: {0,1}]
  %s2 = sld [smem:[#allocation0]]
  $region79: #{tsm_forward.1} parent=0
    _
  %s4 = ssub.s32 1, %s2
  %s5 = scalar_select 0, %s4, %s2
  $region1: #{tsm_forward.1} parent=0
    #allocation2 [shape = 'u8[196608]{0}', space=vmem, size = 0x30000, scoped, tag = 'input window, operand 0']
    #allocation3 [shape = 'u8[196608]{0}', space=vmem, size = 0x30000, scoped, tag = 'output window, operand 0']
    loop: start=0, step=1, limit=4
    $region2: #{tsm_forward.1} parent=1 // loop_pre_header
      _
    $region3: #{tsm_forward.1} parent=1 // loop_header
      %s7 = sphi 0, %s11
      %p8 = scmp.ge.s32.totalorder %s7, 4
      %s14 = sphi 0, %s26
      %s15 = sphi 0, %s22
      %s16 = sphi 0, %s14
      %s17 = sphi 0, %s15
      %s18 = sphi 0, %s16
      %s19 = sphi 0, %s17
      %s31 = sphi 0, %s33
      %s34 = sphi 0, %s31
      %s35 = sphi 0, %s34
      %s51 = sphi 0, %s35
      %s59 = sphi 0, %s61
      %s62 = sphi 0, %s59
      %s63 = sphi 0, %s62
      %s79 = sphi 0, %s63
    $region4: #{tsm_forward.1} parent=1 // loop_header_branch
      %10 = sbr.rel (%p8) target = $region8
    $region5: #{tsm_forward.1} parent=1 // loop_body
      %s12 = ssub.s32 %s7, 1
      %s13 = ssub.s32 %s7, 2
      %s20 = sadd.s32 1, %s15
      %p21 = scmp.ge.s32.totalorder %s20, 1
      %s22 = scalar_select %p21, 0, %s20
      %s23 = sadd.s32 1, %s14
      %s24 = scalar_select %p21, %s23, %s14
      %p25 = scmp.ge.s32.totalorder %s24, 2
      %s26 = scalar_select %p25, 0, %s24
      %s27 = ssub.s32 %s14, %s26
      %s28 = ssub.s32 %s15, %s22
      %s29 = sor.u32 %s27, %s28
      %p30 = scmp.eq.s32.totalorder %s29, 0
      %s32 = sadd.s32 %s31, 1
      %s33 = scalar_select %p30, %s31, %s32
      %p36 = pneg %p30
      %p37 = scmp.eq.s32.totalorder %s7, 1
      %p38 = por %p36, %p37
      %p39 = scmp.ne.s32.totalorder %s31, %s34
      %p40 = scmp.eq.s32.totalorder %s7, 0
      %p41 = por %p39, %p40
      %p42 = scmp.ne.s32.totalorder %s31, %s34
      %p43 = scmp.eq.s32.totalorder %s12, 1
      %p44 = por %p42, %p43
      %p45 = scmp.ne.s32.totalorder %s34, %s35
      %p46 = scmp.eq.s32.totalorder %s12, 0
      %p47 = por %p45, %p46
      %p48 = scmp.ne.s32.totalorder %s34, %s35
      %p49 = scmp.eq.s32.totalorder %s13, 1
      %p50 = por %p48, %p49
      %p52 = scmp.ne.s32.totalorder %s35, %s51
      %p53 = scmp.eq.s32.totalorder %s13, 0
      %p54 = por %p52, %p53
      %s55 = ssub.s32 %s14, %s26
      %s56 = ssub.s32 %s15, %s22
      %s57 = sor.u32 %s55, %s56
      %p58 = scmp.eq.s32.totalorder %s57, 0
      %s60 = sadd.s32 %s59, 1
      %s61 = scalar_select %p58, %s59, %s60
      %p64 = pneg %p58
      %p65 = scmp.eq.s32.totalorder %s7, 1
      %p66 = por %p64, %p65
      %p67 = scmp.ne.s32.totalorder %s59, %s62
      %p68 = scmp.eq.s32.totalorder %s7, 0
      %p69 = por %p67, %p68
      %p70 = scmp.ne.s32.totalorder %s59, %s62
      %p71 = scmp.eq.s32.totalorder %s12, 1
      %p72 = por %p70, %p71
      %p73 = scmp.ne.s32.totalorder %s62, %s63
      %p74 = scmp.eq.s32.totalorder %s12, 0
      %p75 = por %p73, %p74
      %p76 = scmp.ne.s32.totalorder %s62, %s63
      %p77 = scmp.eq.s32.totalorder %s13, 1
      %p78 = por %p76, %p77
      %p80 = scmp.ne.s32.totalorder %s63, %s79
      %p81 = scmp.eq.s32.totalorder %s13, 0
      %p82 = por %p80, %p81
      %p83 = scmp.le.s32.totalorder 1, %s7
      %p84 = scmp.lt.s32.totalorder %s7, 3
      %p85 = pnand %p83, %p84
      %p86 = pneg %p85
      // Predicated region
      $region9: #{tsm_forward.1} parent=5 // pred_check
        _
      $region10: #{tsm_forward.1} parent=5 // pred_check_branch
        %88 = sbr.rel (%p85) target = $region12
      $region11: #{tsm_forward.1} parent=5 // pred_region
        %s89 = ssub.s32 %s7, 1
      $region12: #{tsm_forward.1} parent=5 // pred_fallthru
        _
      %p90 = scmp.lt.s32.totalorder %s7, 2
      // Predicated region
      $region13: #{tsm_forward.1} parent=5 // pred_check
        %p91 = pneg %p90
      $region14: #{tsm_forward.1} parent=5 // pred_check_branch
        %93 = sbr.rel (%p91) target = $region16
      $region15: #{tsm_forward.1} parent=5 // pred_region
        // Predicated region
        $region17: #{tsm_forward.1} parent=15 // pred_check
          %p94 = pneg %p41
        $region18: #{tsm_forward.1} parent=15 // pred_check_branch
          %96 = sbr.rel (%p94) target = $region20
        $region19: #{tsm_forward.1} parent=15 // pred_region
          %s97 = sand.u32 %s31, 1
          %s98 = sand.u32 %s31, 1
          %s99 = smul.addr %s98, 192
          %s100 = scalar_lea.vmem [#allocation2], %s99
          %s101 = smul.u32 4, %s14
          %s102 = smul.u32 2, %s15
          %s103 = smul.addr %s101, 8
          %s104 = sadd.s32 %s102, %s103
          %s105 = smul.addr %s104, 8
          %s106 = scalar_lea.vmem %s0, %s105
          // Predicated region
          $region21: #{tsm_forward.1} parent=19 // pred_check
            _
          $region22: #{tsm_forward.1} parent=19 // pred_check_branch
            %108 = sbr.rel (0) target = $region24
          $region23: #{tsm_forward.1} parent=19 // pred_region
            // Predicated region
            $region25: #{tsm_forward.1} parent=23 // pred_check
              _
            $region26: #{tsm_forward.1} parent=23 // pred_check_branch
              %110 = sbr.rel (0) target = $region28
            $region27: #{tsm_forward.1} parent=23 // pred_region
              loop: start=0, step=1, limit=1
              $region29: #{tsm_forward.1} parent=27 // loop_pre_header
                _
              $region30: #{tsm_forward.1} parent=27 // loop_header
                %s112 = sphi 0, %s116
                %p113 = scmp.ge.s32.totalorder %s112, 1
                %s117 = sphi %s106, %s106
                %s118 = sphi %s100, %s100
              $region31: #{tsm_forward.1} parent=27 // loop_header_branch
                %115 = sbr.rel (%p113) target = $region35
              $region32: #{tsm_forward.1} parent=27 // loop_body
                %v119 = vld [vmem:[%s117] sm:$0xff]
                %120 = vst [vmem:[%s118] sm:$0xff] %v119
                %v121 = vld [vmem:[%s117 + $0x8] sm:$0xff]
                %122 = vst [vmem:[%s118 + $0x8] sm:$0xff] %v121
                %v123 = vld [vmem:[%s117 + $0x10] sm:$0xff]
                %124 = vst [vmem:[%s118 + $0x10] sm:$0xff] %v123
                %v125 = vld [vmem:[%s117 + $0x18] sm:$0xff]
                %126 = vst [vmem:[%s118 + $0x18] sm:$0xff] %v125
                %v127 = vld [vmem:[%s117 + $0x20] sm:$0xff]
                %128 = vst [vmem:[%s118 + $0x20] sm:$0xff] %v127
                %v129 = vld [vmem:[%s117 + $0x28] sm:$0xff]
                %130 = vst [vmem:[%s118 + $0x28] sm:$0xff] %v129
                %v131 = vld [vmem:[%s117 + $0x40] sm:$0xff]
                %132 = vst [vmem:[%s118 + $0x30] sm:$0xff] %v131
                %v133 = vld [vmem:[%s117 + $0x48] sm:$0xff]
                %134 = vst [vmem:[%s118 + $0x38] sm:$0xff] %v133
                %v135 = vld [vmem:[%s117 + $0x50] sm:$0xff]
                %136 = vst [vmem:[%s118 + $0x40] sm:$0xff] %v135
                %v137 = vld [vmem:[%s117 + $0x58] sm:$0xff]
                %138 = vst [vmem:[%s118 + $0x48] sm:$0xff] %v137
                %v139 = vld [vmem:[%s117 + $0x60] sm:$0xff]
                %140 = vst [vmem:[%s118 + $0x50] sm:$0xff] %v139
                %v141 = vld [vmem:[%s117 + $0x68] sm:$0xff]
                %142 = vst [vmem:[%s118 + $0x58] sm:$0xff] %v141
                %v143 = vld [vmem:[%s117 + $0x80] sm:$0xff]
                %144 = vst [vmem:[%s118 + $0x60] sm:$0xff] %v143
                %v145 = vld [vmem:[%s117 + $0x88] sm:$0xff]
                %146 = vst [vmem:[%s118 + $0x68] sm:$0xff] %v145
                %v147 = vld [vmem:[%s117 + $0x90] sm:$0xff]
                %148 = vst [vmem:[%s118 + $0x70] sm:$0xff] %v147
                %v149 = vld [vmem:[%s117 + $0x98] sm:$0xff]
                %150 = vst [vmem:[%s118 + $0x78] sm:$0xff] %v149
                %v151 = vld [vmem:[%s117 + $0xa0] sm:$0xff]
                %152 = vst [vmem:[%s118 + $0x80] sm:$0xff] %v151
                %v153 = vld [vmem:[%s117 + $0xa8] sm:$0xff]
                %154 = vst [vmem:[%s118 + $0x88] sm:$0xff] %v153
                %v155 = vld [vmem:[%s117 + $0xc0] sm:$0xff]
                %156 = vst [vmem:[%s118 + $0x90] sm:$0xff] %v155
                %v157 = vld [vmem:[%s117 + $0xc8] sm:$0xff]
                %158 = vst [vmem:[%s118 + $0x98] sm:$0xff] %v157
                %v159 = vld [vmem:[%s117 + $0xd0] sm:$0xff]
                %160 = vst [vmem:[%s118 + $0xa0] sm:$0xff] %v159
                %v161 = vld [vmem:[%s117 + $0xd8] sm:$0xff]
                %162 = vst [vmem:[%s118 + $0xa8] sm:$0xff] %v161
                %v163 = vld [vmem:[%s117 + $0xe0] sm:$0xff]
                %164 = vst [vmem:[%s118 + $0xb0] sm:$0xff] %v163
                %v165 = vld [vmem:[%s117 + $0xe8] sm:$0xff]
                %166 = vst [vmem:[%s118 + $0xb8] sm:$0xff] %v165
              $region33: #{tsm_forward.1} parent=27 // loop_footer
                %s116 = sadd.s32 1, %s112
              $region34: #{tsm_forward.1} parent=27 // loop_footer_branch
                %111 = sbr.rel target = $region30
              $region35: #{tsm_forward.1} parent=27 // loop_exit
                _
            $region28: #{tsm_forward.1} parent=23 // pred_fallthru
              _
            // Predicated region
            $region36: #{tsm_forward.1} parent=23 // pred_check
              _
            $region37: #{tsm_forward.1} parent=23 // pred_check_branch
              %168 = sbr.rel target = $region39
            $region38: #{tsm_forward.1} parent=23 // pred_region
              _
            $region39: #{tsm_forward.1} parent=23 // pred_fallthru
              _
          $region24: #{tsm_forward.1} parent=19 // pred_fallthru
            _
          %169 = vnop
        $region20: #{tsm_forward.1} parent=15 // pred_fallthru
          _
      $region16: #{tsm_forward.1} parent=5 // pred_fallthru
        _
      %p170 = scmp.le.s32.totalorder 1, %s7
      %p171 = scmp.lt.s32.totalorder %s7, 3
      %p172 = pnand %p170, %p171
      %p173 = pneg %p172
      // Predicated region
      $region40: #{tsm_forward.1} parent=5 // pred_check
        _
      $region41: #{tsm_forward.1} parent=5 // pred_check_branch
        %175 = sbr.rel (%p172) target = $region43
      $region42: #{tsm_forward.1} parent=5 // pred_region
        %s176 = ssub.s32 %s7, 1
        %s177 = sand.u32 %s34, 1
        %s178 = sand.u32 %s34, 1
        %s179 = smul.addr %s178, 192
        %s180 = scalar_lea.vmem [#allocation2], %s179
        // Predicated region
        $region44: #{tsm_forward.1} parent=42 // pred_check
          %p181 = pneg %p47
        $region45: #{tsm_forward.1} parent=42 // pred_check_branch
          %183 = sbr.rel (%p181) target = $region47
        $region46: #{tsm_forward.1} parent=42 // pred_region
          _
        $region47: #{tsm_forward.1} parent=42 // pred_fallthru
          _
        %s184 = sand.u32 %s34, 1
        %s185 = sand.u32 %s34, 1
        %s186 = smul.addr %s185, 192
        %s187 = scalar_lea.vmem [#allocation2], %s186
        %p188 = pneg %p47
        %p189 = pneg %p44
        %p190 = pneg %p75
        %p191 = pneg %p72
        %s192 = sand.u32 %s62, 1
        %s193 = sand.u32 %s62, 1
        %s194 = smul.addr %s193, 192
        %s195 = scalar_lea.vmem [#allocation3], %s194
        %s196 = smul.u32 4, %s16
        %s197 = smul.u32 2, %s17
        %s198 = smul.u32 4, %s16
        %s199 = smul.u32 2, %s17
        %200 = vst [vmem:[%s195] sm:$0xff] 0.0
        %201 = vst [vmem:[%s195 + $0x8] sm:$0xff] 0.0
        %202 = vst [vmem:[%s195 + $0x10] sm:$0x3] 0.0
        %203 = vst [vmem:[%s195 + $0x18] sm:$0x3] 0.0
        %v204 = vld [vmem:[%s180] sm:$0xff]
        %v205 = vld [vmem:[%s180 + $0x8] sm:$0xff]
        %v206 = vld [vmem:[%s180 + $0x10] sm:$0x3]
        %v207 = vld [vmem:[%s180 + $0x18] sm:$0x3]
        %v208 = vld [vmem:[%s180 + $0x30] sm:$0xff]
        %v209 = vld [vmem:[%s180 + $0x38] sm:$0xff]
        %v210 = vld [vmem:[%s180 + $0x40] sm:$0x3]
        %v211 = vld [vmem:[%s180 + $0x48] sm:$0x3]
        %v212 = vld [vmem:[%s180 + $0x60] sm:$0xff]
        %v213 = vld [vmem:[%s180 + $0x68] sm:$0xff]
        %v214 = vld [vmem:[%s180 + $0x70] sm:$0x3]
        %v215 = vld [vmem:[%s180 + $0x78] sm:$0x3]
        %s216 = scalar_lea.vmem %s195, 48 [#allocation3]
        %217 = vst [vmem:[%s216] sm:$0xff] %v204
        %218 = vst [vmem:[%s216 + $0x8] sm:$0xff] %v205
        %219 = vst [vmem:[%s216 + $0x10] sm:$0x3] %v206
        %220 = vst [vmem:[%s216 + $0x18] sm:$0x3] %v207
        %221 = vst [vmem:[%s216 + $0x30] sm:$0xff] %v208
        %222 = vst [vmem:[%s216 + $0x38] sm:$0xff] %v209
        %223 = vst [vmem:[%s216 + $0x40] sm:$0x3] %v210
        %224 = vst [vmem:[%s216 + $0x48] sm:$0x3] %v211
        %225 = vst [vmem:[%s216 + $0x60] sm:$0xff] %v212
        %226 = vst [vmem:[%s216 + $0x68] sm:$0xff] %v213
        %227 = vst [vmem:[%s216 + $0x70] sm:$0x3] %v214
        %228 = vst [vmem:[%s216 + $0x78] sm:$0x3] %v215
        %s229 = scalar_lea.vmem %s195, 144 [#allocation3]
        %230 = vst [vmem:[%s229 + $0x10] sm:$0xfc] 0.0
        %231 = vst [vmem:[%s229 + $0x18] sm:$0xfc] 0.0
        %232 = vst [vmem:[%s229 + $0x20] sm:$0xf] 0.0
        %233 = vst [vmem:[%s229 + $0x28] sm:$0xf] 0.0
        %s234 = scalar_lea.vmem %s180, 48 [#allocation2]
        %v235 = vld [vmem:[%s234 + $0x10] sm:$0xfc]
        %v236 = vld [vmem:[%s234 + $0x18] sm:$0xfc]
        %v237 = vld [vmem:[%s234 + $0x20] sm:$0xf]
        %v238 = vld [vmem:[%s234 + $0x28] sm:$0xf]
        %v239 = vld [vmem:[%s234 + $0x40] sm:$0xfc]
        %v240 = vld [vmem:[%s234 + $0x48] sm:$0xfc]
        %v241 = vld [vmem:[%s234 + $0x50] sm:$0xf]
        %v242 = vld [vmem:[%s234 + $0x58] sm:$0xf]
        %v243 = vld [vmem:[%s234 + $0x70] sm:$0xfc]
        %v244 = vld [vmem:[%s234 + $0x78] sm:$0xfc]
        %v245 = vld [vmem:[%s234 + $0x80] sm:$0xf]
        %v246 = vld [vmem:[%s234 + $0x88] sm:$0xf]
        %247 = vst [vmem:[%s195 + $0x10] sm:$0xfc] %v235
        %248 = vst [vmem:[%s195 + $0x18] sm:$0xfc] %v236
        %249 = vst [vmem:[%s195 + $0x20] sm:$0xf] %v237
        %250 = vst [vmem:[%s195 + $0x28] sm:$0xf] %v238
        %251 = vst [vmem:[%s195 + $0x40] sm:$0xfc] %v239
        %252 = vst [vmem:[%s195 + $0x48] sm:$0xfc] %v240
        %253 = vst [vmem:[%s195 + $0x50] sm:$0xf] %v241
        %254 = vst [vmem:[%s195 + $0x58] sm:$0xf] %v242
        %255 = vst [vmem:[%s195 + $0x70] sm:$0xfc] %v243
        %256 = vst [vmem:[%s195 + $0x78] sm:$0xfc] %v244
        %257 = vst [vmem:[%s195 + $0x80] sm:$0xf] %v245
        %258 = vst [vmem:[%s195 + $0x88] sm:$0xf] %v246
        %v259 = vld [vmem:[%s180 + $0x20] sm:$0xf0]
        %v260 = vld [vmem:[%s180 + $0x28] sm:$0xf0]
        %v261 = vld [vmem:[%s180 + $0x50] sm:$0xf0]
        %v262 = vld [vmem:[%s180 + $0x58] sm:$0xf0]
        %v263 = vld [vmem:[%s180 + $0x80] sm:$0xf0]
        %v264 = vld [vmem:[%s180 + $0x88] sm:$0xf0]
        %v265 = vld [vmem:[%s180 + $0xb0] sm:$0xf0]
        %v266 = vld [vmem:[%s180 + $0xb8] sm:$0xf0]
        %267 = vst [vmem:[%s195 + $0x20] sm:$0xf0] %v259
        %268 = vst [vmem:[%s195 + $0x28] sm:$0xf0] %v260
        %269 = vst [vmem:[%s195 + $0x50] sm:$0xf0] %v261
        %270 = vst [vmem:[%s195 + $0x58] sm:$0xf0] %v262
        %271 = vst [vmem:[%s195 + $0x80] sm:$0xf0] %v263
        %272 = vst [vmem:[%s195 + $0x88] sm:$0xf0] %v264
        %273 = vst [vmem:[%s195 + $0xb0] sm:$0xf0] %v265
        %274 = vst [vmem:[%s195 + $0xb8] sm:$0xf0] %v266
        %s275 = sand.u32 %s62, 1
        %s276 = sand.u32 %s62, 1
        %s277 = smul.addr %s276, 192
        %s278 = scalar_lea.vmem [#allocation3], %s277
        // Predicated region
        $region48: #{tsm_forward.1} parent=42 // pred_check
          %p279 = pneg %p72
        $region49: #{tsm_forward.1} parent=42 // pred_check_branch
          %281 = sbr.rel (%p279) target = $region51
        $region50: #{tsm_forward.1} parent=42 // pred_region
          %s282 = smul.u32 4, %s16
          %s283 = smul.u32 2, %s17
          %s284 = smul.addr %s282, 8
          %s285 = sadd.s32 %s283, %s284
          %s286 = smul.addr %s285, 8
          %s287 = scalar_lea.vmem %s1, %s286
          // Predicated region
          $region52: #{tsm_forward.1} parent=50 // pred_check
            _
          $region53: #{tsm_forward.1} parent=50 // pred_check_branch
            %289 = sbr.rel (0) target = $region55
          $region54: #{tsm_forward.1} parent=50 // pred_region
            // Predicated region
            $region56: #{tsm_forward.1} parent=54 // pred_check
              _
            $region57: #{tsm_forward.1} parent=54 // pred_check_branch
              %291 = sbr.rel (0) target = $region59
            $region58: #{tsm_forward.1} parent=54 // pred_region
              loop: start=0, step=1, limit=1
              $region60: #{tsm_forward.1} parent=58 // loop_pre_header
                _
              $region61: #{tsm_forward.1} parent=58 // loop_header
                %s293 = sphi 0, %s297
                %p294 = scmp.ge.s32.totalorder %s293, 1
                %s298 = sphi %s278, %s278
                %s299 = sphi %s287, %s287
              $region62: #{tsm_forward.1} parent=58 // loop_header_branch
                %296 = sbr.rel (%p294) target = $region66
              $region63: #{tsm_forward.1} parent=58 // loop_body
                %v300 = vld [vmem:[%s298] sm:$0xff]
                %301 = vst [vmem:[%s299] sm:$0xff] %v300
                %v302 = vld [vmem:[%s298 + $0x8] sm:$0xff]
                %303 = vst [vmem:[%s299 + $0x8] sm:$0xff] %v302
                %v304 = vld [vmem:[%s298 + $0x10] sm:$0xff]
                %305 = vst [vmem:[%s299 + $0x10] sm:$0xff] %v304
                %v306 = vld [vmem:[%s298 + $0x18] sm:$0xff]
                %307 = vst [vmem:[%s299 + $0x18] sm:$0xff] %v306
                %v308 = vld [vmem:[%s298 + $0x20] sm:$0xff]
                %309 = vst [vmem:[%s299 + $0x20] sm:$0xff] %v308
                %v310 = vld [vmem:[%s298 + $0x28] sm:$0xff]
                %311 = vst [vmem:[%s299 + $0x28] sm:$0xff] %v310
                %v312 = vld [vmem:[%s298 + $0x30] sm:$0xff]
                %313 = vst [vmem:[%s299 + $0x40] sm:$0xff] %v312
                %v314 = vld [vmem:[%s298 + $0x38] sm:$0xff]
                %315 = vst [vmem:[%s299 + $0x48] sm:$0xff] %v314
                %v316 = vld [vmem:[%s298 + $0x40] sm:$0xff]
                %317 = vst [vmem:[%s299 + $0x50] sm:$0xff] %v316
                %v318 = vld [vmem:[%s298 + $0x48] sm:$0xff]
                %319 = vst [vmem:[%s299 + $0x58] sm:$0xff] %v318
                %v320 = vld [vmem:[%s298 + $0x50] sm:$0xff]
                %321 = vst [vmem:[%s299 + $0x60] sm:$0xff] %v320
                %v322 = vld [vmem:[%s298 + $0x58] sm:$0xff]
                %323 = vst [vmem:[%s299 + $0x68] sm:$0xff] %v322
                %v324 = vld [vmem:[%s298 + $0x60] sm:$0xff]
                %325 = vst [vmem:[%s299 + $0x80] sm:$0xff] %v324
                %v326 = vld [vmem:[%s298 + $0x68] sm:$0xff]
                %327 = vst [vmem:[%s299 + $0x88] sm:$0xff] %v326
                %v328 = vld [vmem:[%s298 + $0x70] sm:$0xff]
                %329 = vst [vmem:[%s299 + $0x90] sm:$0xff] %v328
                %v330 = vld [vmem:[%s298 + $0x78] sm:$0xff]
                %331 = vst [vmem:[%s299 + $0x98] sm:$0xff] %v330
                %v332 = vld [vmem:[%s298 + $0x80] sm:$0xff]
                %333 = vst [vmem:[%s299 + $0xa0] sm:$0xff] %v332
                %v334 = vld [vmem:[%s298 + $0x88] sm:$0xff]
                %335 = vst [vmem:[%s299 + $0xa8] sm:$0xff] %v334
                %v336 = vld [vmem:[%s298 + $0x90] sm:$0xff]
                %337 = vst [vmem:[%s299 + $0xc0] sm:$0xff] %v336
                %v338 = vld [vmem:[%s298 + $0x98] sm:$0xff]
                %339 = vst [vmem:[%s299 + $0xc8] sm:$0xff] %v338
                %v340 = vld [vmem:[%s298 + $0xa0] sm:$0xff]
                %341 = vst [vmem:[%s299 + $0xd0] sm:$0xff] %v340
                %v342 = vld [vmem:[%s298 + $0xa8] sm:$0xff]
                %343 = vst [vmem:[%s299 + $0xd8] sm:$0xff] %v342
                %v344 = vld [vmem:[%s298 + $0xb0] sm:$0xff]
                %345 = vst [vmem:[%s299 + $0xe0] sm:$0xff] %v344
                %v346 = vld [vmem:[%s298 + $0xb8] sm:$0xff]
                %347 = vst [vmem:[%s299 + $0xe8] sm:$0xff] %v346
              $region64: #{tsm_forward.1} parent=58 // loop_footer
                %s297 = sadd.s32 1, %s293
              $region65: #{tsm_forward.1} parent=58 // loop_footer_branch
                %292 = sbr.rel target = $region61
              $region66: #{tsm_forward.1} parent=58 // loop_exit
                _
            $region59: #{tsm_forward.1} parent=54 // pred_fallthru
              _
            // Predicated region
            $region67: #{tsm_forward.1} parent=54 // pred_check
              _
            $region68: #{tsm_forward.1} parent=54 // pred_check_branch
              %349 = sbr.rel target = $region70
            $region69: #{tsm_forward.1} parent=54 // pred_region
              _
            $region70: #{tsm_forward.1} parent=54 // pred_fallthru
              _
          $region55: #{tsm_forward.1} parent=50 // pred_fallthru
            _
          %350 = vnop
        $region51: #{tsm_forward.1} parent=42 // pred_fallthru
          _
      $region43: #{tsm_forward.1} parent=5 // pred_fallthru
        _
      %p351 = scmp.le.s32.totalorder 2, %s7
      // Predicated region
      $region71: #{tsm_forward.1} parent=5 // pred_check
        %p352 = pneg %p351
      $region72: #{tsm_forward.1} parent=5 // pred_check_branch
        %354 = sbr.rel (%p352) target = $region74
      $region73: #{tsm_forward.1} parent=5 // pred_region
        %s355 = ssub.s32 %s7, 2
        // Predicated region
        $region75: #{tsm_forward.1} parent=73 // pred_check
          %p356 = pneg %p78
        $region76: #{tsm_forward.1} parent=73 // pred_check_branch
          %358 = sbr.rel (%p356) target = $region78
        $region77: #{tsm_forward.1} parent=73 // pred_region
          %s359 = sand.u32 %s63, 1
          %s360 = sand.u32 %s63, 1
          %s361 = smul.addr %s360, 192
          %s362 = scalar_lea.vmem [#allocation3], %s361
        $region78: #{tsm_forward.1} parent=73 // pred_fallthru
          _
      $region74: #{tsm_forward.1} parent=5 // pred_fallthru
        _
    $region6: #{tsm_forward.1} parent=1 // loop_footer
      %s11 = sadd.s32 1, %s7
    $region7: #{tsm_forward.1} parent=1 // loop_footer_branch
      %6 = sbr.rel target = $region3
    $region8: #{tsm_forward.1} parent=1 // loop_exit
      _

</llo_original>
